<compile_context>
chip_gen: v5e
topology: v5e:2x2
jax: 0.10.0
libtpu: 0.0.40
codegen_flags: <defaults>
</compile_context>

<pallas_src>
import functools

import jax
import jax.numpy as jnp
from jax.experimental import pallas as pl
from jax.experimental.pallas import tpu as pltpu


_SUBLANE = 16          # row-tile granularity: keeps bf16 sublane packing aligned
_MAX_ROW_TILE = 4096   # upper bound on rows per grid step


def _round_up(x, m):
    return (x + m - 1) // m * m


# --------------------------------------------------------------------------
# Kernels: numerically-stable (log_)softmax over the lane (vocab) axis,
# accumulated in float32 regardless of input dtype (matches `.float()`).
# --------------------------------------------------------------------------
def _log_softmax_kernel(x_ref, o_ref):
    x = x_ref[...]
    # Row max in the native input dtype (exact for bf16/f32, harmless for int):
    # keeps only ONE full-tile f32 temporary live at a time.
    m = jnp.max(x, axis=-1, keepdims=True)
    shifted = x.astype(jnp.float32) - m.astype(jnp.float32)     # `.float()` cast
    lse = jnp.log(jnp.sum(jnp.exp(shifted), axis=-1, keepdims=True))
    o_ref[...] = (shifted - lse).astype(o_ref.dtype)


def _softmax_kernel(x_ref, o_ref):
    x = x_ref[...]
    m = jnp.max(x, axis=-1, keepdims=True)
    e = jnp.exp(x.astype(jnp.float32) - m.astype(jnp.float32))  # `.float()` cast
    denom = jnp.sum(e, axis=-1, keepdims=True)
    # Exact divide: per-row scalar, negligible cost, PyTorch-equivalent numerics.
    o_ref[...] = (e / denom).astype(o_ref.dtype)


# --------------------------------------------------------------------------
# Tiling / VMEM budgeting
# --------------------------------------------------------------------------
def _vmem_limit_bytes():
    """Generation-aware scoped-VMEM limit (default scoped limit is 16-32 MiB)."""
    cap = 64 * 1024 * 1024                    # conservative fallback (v7x physical)
    try:
        cap = int(pltpu.get_tpu_info().vmem_capacity_bytes)
    except Exception:                          # info query unavailable -> fallback
        pass
    # leave headroom for compiler temporaries / other scoped allocations
    return int(min(100 * 1024 * 1024, (cap * 3) // 4))


def _num_tensorcores():
    """Best-effort TensorCore count per chip (2 on v7x, 1 on v5e/v6e)."""
    try:
        info = pltpu.get_tpu_info()
        for attr in ("num_tensorcores", "tensorcore_count", "num_cores", "core_count"):
            n = getattr(info, attr, None)
            if n:
                return int(n)
    except Exception:
        pass
    return 1


def _pick_row_tile(rows, vocab, in_itemsize, out_itemsize, vmem_limit, num_tc):
    """Largest row tile that fits the VMEM budget.

    Purely HBM-bandwidth-bound kernel: big tiles amortize the ~0.35 us per
    grid-step pipeline overhead and keep the DMA engine saturated.
    """
    # double-buffered input + output blocks plus ~8 B/elem of live f32 temporaries
    bytes_per_row = vocab * (2 * in_itemsize + 2 * out_itemsize + 8)
    budget = max(2 * 1024 * 1024, (vmem_limit * 2) // 3)
    tile = budget // bytes_per_row
    tile = max(_SUBLANE, min(_MAX_ROW_TILE, (tile // _SUBLANE) * _SUBLANE))
    if num_tc >= 2 and rows > num_tc * _SUBLANE:
        # Multi-TensorCore chip only: round the step count to a multiple of the
        # core count so HBM traffic is balanced across cores.
        steps = max(num_tc, _round_up(pl.cdiv(rows, tile), num_tc))
        tile = min(tile, max(_SUBLANE, _round_up(pl.cdiv(rows, steps), _SUBLANE)))
    return tile


@functools.partial(jax.jit, static_argnames=("log_probs",))
def _normalized_probs_2d(logits_2d, *, log_probs):
    rows, vocab = logits_2d.shape
    out_dtype = jnp.float32                     # matches the `.float()` contract
    in_itemsize = jnp.dtype(logits_2d.dtype).itemsize
    out_itemsize = jnp.dtype(out_dtype).itemsize

    vmem_limit = _vmem_limit_bytes()
    num_tc = _num_tensorcores()
    row_tile = _pick_row_tile(rows, vocab, in_itemsize, out_itemsize,
                              vmem_limit, num_tc)

    if rows <= row_tile:
        # Single full-extent block (full array dims are always a legal block shape).
        row_tile = rows
        grid = 1
    else:
        # Ragged final block: out-of-bounds rows are read as garbage, but their
        # outputs are masked on store and the softmax reduction is per-row, so
        # valid rows are never contaminated.  No wrapper pad/slice needed.
        grid = pl.cdiv(rows, row_tile)

    kernel = _log_softmax_kernel if log_probs else _softmax_kernel

    return pl.pallas_call(
        kernel,
        out_shape=jax.ShapeDtypeStruct((rows, vocab), out_dtype),
        grid=(grid,),
        in_specs=[pl.BlockSpec((row_tile, vocab), lambda i: (i, 0))],
        out_specs=pl.BlockSpec((row_tile, vocab), lambda i: (i, 0)),
        compiler_params=pltpu.CompilerParams(
            dimension_semantics=("parallel",),
            vmem_limit_bytes=vmem_limit,
        ),
        cost_estimate=pl.CostEstimate(
            flops=4 * rows * vocab,
            transcendentals=rows * vocab,
            bytes_accessed=rows * vocab * (in_itemsize + out_itemsize),
        ),
    )(logits_2d)


# --------------------------------------------------------------------------
# Module port
# --------------------------------------------------------------------------
class FairseqDecoder:
    """Pallas/JAX port of fairseq's FairseqDecoder base class."""

    def __init__(self, dictionary):
        self.dictionary = dictionary

    def forward(self, prev_output_tokens, encoder_out):
        # TODO(synk): abstract in the base class (raises in PyTorch too).
        raise NotImplementedError

    def get_normalized_probs(self, net_output, log_probs, _=None):
        """Get normalized probabilities (or log probs) from a net's output."""
        logits = net_output[0]
        orig_shape = logits.shape
        vocab = orig_shape[-1]
        out = _normalized_probs_2d(logits.reshape(-1, vocab),
                                   log_probs=bool(log_probs))
        return out.reshape(orig_shape)

    def max_positions(self):
        # TODO(synk): abstract in the base class (raises in PyTorch too).
        raise NotImplementedError

    def upgrade_state_dict(self, state_dict):
        return state_dict


if __name__ == "__main__":
    key = jax.random.PRNGKey(0)

    # deliberately NOT tile/lane aligned: exercises full-dim vocab + ragged rows
    batch, seq, vocab = 2, 7, 100
    logits = jax.random.normal(key, (batch, seq, vocab), dtype=jnp.bfloat16)
    net_output = (logits,)

    decoder = FairseqDecoder(dictionary=list(range(vocab)))

    log_p = decoder.get_normalized_probs(net_output, log_probs=True)
    p = decoder.get_normalized_probs(net_output, log_probs=False)
    jax.block_until_ready((log_p, p))

    # sanity check vs. pure-JAX reference
    ref_log = jax.nn.log_softmax(logits.astype(jnp.float32), axis=-1)
    ref_p = jax.nn.softmax(logits.astype(jnp.float32), axis=-1)

    assert log_p.shape == logits.shape and p.shape == logits.shape
    assert log_p.dtype == jnp.float32 and p.dtype == jnp.float32
    assert jnp.allclose(log_p, ref_log, atol=1e-4, rtol=1e-4)
    assert jnp.allclose(p, ref_p, atol=1e-4, rtol=1e-4)
    assert jnp.allclose(jnp.sum(p, axis=-1), 1.0, atol=1e-4)

    # larger 2-D case: forces a multi-step grid with a ragged final block
    rows_big, vocab_big = 5000, 128
    big = jax.random.normal(jax.random.PRNGKey(1), (rows_big, vocab_big),
                            dtype=jnp.float32)
    big_out = decoder.get_normalized_probs((big,), log_probs=True)
    jax.block_until_ready(big_out)
    assert jnp.allclose(big_out, jax.nn.log_softmax(big, axis=-1),
                        atol=1e-4, rtol=1e-4)

    print("KERNEL_OK")
</pallas_src>

<mosaic_0001>
module attributes {stable_mosaic.version = 11 : i64} {
  func.func @_log_softmax_kernel(%arg0: i32, %arg1: memref<14x100xbf16, #tpu.memory_space<vmem>>, %arg2: memref<14x100xf32, #tpu.memory_space<vmem>>) attributes {dimension_semantics = [#tpu.dimension_semantics<parallel>], iteration_bounds = array<i64: 1>, scalar_prefetch = 0 : i64, scratch_operands = 0 : i64, tpu.core_type = #tpu.core_type<tc>, window_params = [{transform_indices = @transform_0, window_bounds = array<i64: 14, 100>}, {transform_indices = @transform_1, window_bounds = array<i64: 14, 100>}]} {
    %c0 = arith.constant 0 : index
    %c0_0 = arith.constant 0 : index
    %0 = vector.load %arg1[%c0, %c0_0] : memref<14x100xbf16, #tpu.memory_space<vmem>>, vector<14x100xbf16>
    %cst = arith.constant dense<0xFF80> : vector<14xbf16>
    %1 = vector.multi_reduction <maximumf>, %0, %cst [1] : vector<14x100xbf16> to vector<14xbf16>
    %2 = vector.shape_cast %1 : vector<14xbf16> to vector<14x1xbf16>
    %3 = arith.extf %0 : vector<14x100xbf16> to vector<14x100xf32>
    %4 = arith.extf %2 : vector<14x1xbf16> to vector<14x1xf32>
    %5 = vector.broadcast %4 : vector<14x1xf32> to vector<14x100xf32>
    %6 = arith.subf %3, %5 : vector<14x100xf32>
    %7 = math.exp %6 : vector<14x100xf32>
    %cst_1 = arith.constant dense<0.000000e+00> : vector<14xf32>
    %8 = vector.multi_reduction <add>, %7, %cst_1 [1] : vector<14x100xf32> to vector<14xf32>
    %9 = vector.shape_cast %8 : vector<14xf32> to vector<14x1xf32>
    %10 = math.log %9 : vector<14x1xf32>
    %11 = vector.broadcast %10 : vector<14x1xf32> to vector<14x100xf32>
    %12 = arith.subf %6, %11 : vector<14x100xf32>
    %c0_2 = arith.constant 0 : index
    %c0_3 = arith.constant 0 : index
    %13 = vector.load %arg2[%c0_2, %c0_3] : memref<14x100xf32, #tpu.memory_space<vmem>>, vector<14x100xf32>
    tpu.vector_store %arg2[%c0_2, %c0_3], %12 {strides = array<i32>} : memref<14x100xf32, #tpu.memory_space<vmem>>, vector<14x100xf32>,
    return
  }
  func.func @transform_0(%arg0: i32) -> (i32, i32) {
    %c0_i32 = arith.constant 0 : i32
    %c0_i32_0 = arith.constant 0 : i32
    return %arg0, %c0_i32 : i32, i32
  }
  func.func @transform_1(%arg0: i32) -> (i32, i32) {
    %c0_i32 = arith.constant 0 : i32
    %c0_i32_0 = arith.constant 0 : i32
    return %arg0, %c0_i32 : i32, i32
  }
}

</mosaic_0001>

<llo_original>
// kernel: _normalized_probs_2d.1
$region0: #{_normalized_probs_2d.1}
  #allocation0 [shape = 'u32[]', space=smem, size = 0x4, offset = 0x4, fixed_abs, tag = 'smem constant byte address 0x4 - core index']
  #allocation1 [shape = 'u32[72,128]{1,0:T(1,128)}', space=vmem, size = 0x9000, scoped, tag = 'internal scratch']
  %s0 = inlined_call_operand.hbm [shape: bf16[14,100], index: 0, kind: input, shape index: {}]
  %s1 = inlined_call_operand.hbm [shape: f32[14,100], index: 1, kind: output, shape index: {}]
  %s2 = sld [smem:[#allocation0]]
  $region18: #{_normalized_probs_2d.1} parent=0
    _
  %s4 = ssub.s32 1, %s2
  %s5 = scalar_select 0, %s4, %s2
  $region1: #{_normalized_probs_2d.1} parent=0
    #allocation2 [shape = 'u8[4096]{0}', space=vmem, size = 0x1000, scoped, tag = 'input window, operand 0, single buffered']
    #allocation3 [shape = 's32[1]{0}', space=sflag, size = 0x4, scoped, tag = 'scoped memory for _normalized_probs_2d.1']
    #allocation4 [shape = 's32[1]{0}', space=sflag, size = 0x4, scoped, tag = 'scoped memory for _normalized_probs_2d.1']
    #allocation5 [shape = 'u8[8192]{0}', space=vmem, size = 0x2000, scoped, tag = 'output window, operand 0, single buffered']
    %6 = vsyncpa [#allocation3], 0
    %7 = vsyncpa [#allocation4], 0
    // Predicated region
    $region2: #{_normalized_probs_2d.1} parent=1 // pred_check
      _
    $region3: #{_normalized_probs_2d.1} parent=1 // pred_check_branch
      %9 = sbr.rel (0) target = $region5
    $region4: #{_normalized_probs_2d.1} parent=1 // pred_region
      %11 = vsyncadd [#allocation3], 0
      %s12 = sshll.u32 %s0, 4
      %s13 = int_to_ptr.hbm [resolvable:$true] %s12
      %s14 = sshll.u32 [#allocation2], 4
      %s15 = int_to_ptr.vmem [resolvable:$true] %s14
      %20 = dma.hbm_to_vmem [thread:$0]  %s13, 128, %s15, [#allocation3], 64, 64, 4
    $region5: #{_normalized_probs_2d.1} parent=1 // pred_fallthru
      _
    // Predicated region
    $region6: #{_normalized_probs_2d.1} parent=1 // pred_check
      _
    $region7: #{_normalized_probs_2d.1} parent=1 // pred_check_branch
      %22 = sbr.rel (0) target = $region9
    $region8: #{_normalized_probs_2d.1} parent=1 // pred_region
      %24 = dma.done [#allocation3], 128
    $region9: #{_normalized_probs_2d.1} parent=1 // pred_fallthru
      _
    %v25 = vld [vmem:[#allocation2] sm:$0xf]
    %v26 = vld [vmem:[#allocation2 + $0x4] sm:$0x7]
    %v27 = vunpack.c.l.bf16 %v25
    %v28 = vunpack.c.l.bf16 %v26
    %vm29 = vcmask 818176
    %v30 = vsel %vm29, %v27, -inf
    %31 = vmax.xlane.f32.xlu0 %v30
    %v32 = vpop.xlane.xlu0 %31
    %vm33 = vcmask 816128
    %v34 = vsel %vm33, %v28, -inf
    %35 = vmax.xlane.f32.xlu0 %v34
    %v36 = vpop.xlane.xlu0 %35
    %v37 = vpack.c.bf16 %v32, %v32
    %v38 = vpack.c.bf16 %v36, %v36
    %v39 = vunpack.c.l.bf16 %v37
    %v40 = vunpack.c.l.bf16 %v38
    %v41 = vsub.f32 %v27, %v39
    %v42 = vsub.f32 %v28, %v40
    %v43 = vmul.f32 %v41, 1.442695
    %v44 = vpow.pop %v43
    %v45 = vmul.f32 %v42, 1.442695
    %v46 = vpow.pop %v45
    %v47 = vsel %vm29, %v44, 0.0
    %48 = vadd.xlane.f32.xlu0 %v47
    %v49 = vpop.xlane.xlu0 %48
    %v50 = vsel %vm33, %v46, 0.0
    %51 = vadd.xlane.f32.xlu0 %v50
    %v52 = vpop.xlane.xlu0 %51
    %v53 = vlog2.pop %v49
    %v54 = vmul.f32 %v53, 0.6931472
    %v55 = vlog2.pop %v52
    %v56 = vmul.f32 %v55, 0.6931472
    %v57 = vsub.f32 %v41, %v54
    %v58 = vsub.f32 %v42, %v56
    %59 = vst.msk [vmem:[#allocation5] sm:$0xff] %vm29, %v57
    %60 = vst.msk [vmem:[#allocation5 + $0x8] sm:$0x3f] %vm33, %v58
    // Predicated region
    $region10: #{_normalized_probs_2d.1} parent=1 // pred_check
      _
    $region11: #{_normalized_probs_2d.1} parent=1 // pred_check_branch
      %62 = sbr.rel (0) target = $region13
    $region12: #{_normalized_probs_2d.1} parent=1 // pred_region
      %64 = vsyncadd [#allocation4], 0
      %s65 = sshll.u32 [#allocation5], 4
      %s66 = int_to_ptr.vmem [resolvable:$true] %s65
      %s67 = sshll.u32 %s1, 4
      %s68 = int_to_ptr.hbm [resolvable:$true] %s67
      %73 = dma.vmem_to_hbm [thread:$0]  %s66, 256, %s68, [#allocation4], 128, 128, 8
    $region13: #{_normalized_probs_2d.1} parent=1 // pred_fallthru
      _
    // Predicated region
    $region14: #{_normalized_probs_2d.1} parent=1 // pred_check
      _
    $region15: #{_normalized_probs_2d.1} parent=1 // pred_check_branch
      %75 = sbr.rel (0) target = $region17
    $region16: #{_normalized_probs_2d.1} parent=1 // pred_region
      %77 = dma.done [#allocation4], 256
    $region17: #{_normalized_probs_2d.1} parent=1 // pred_fallthru
      _
    %78 = vsyncpa [#allocation3], 1
    %79 = vsyncpa [#allocation4], 1

</llo_original>
